<compile_context>
chip_gen: v5e
topology: v5e:2x2
jax: 0.10.0
libtpu: 0.0.40
codegen_flags: <defaults>
</compile_context>

<pallas_src>
import numpy as np
import jax
import jax.numpy as jnp
from jax.experimental import pallas as pl
from jax.experimental.pallas import tpu as pltpu


_VMEM_LIMIT = 48 * 1024 * 1024  # well under physical VMEM on v5e/v6e/v7x


# ---------------------------------------------------------------------------
# Kernel A: tiled segment-mean reduction + Linear2 + ReLU + folded Linear1-g
#   acc += M_tile @ x_tile                      (accumulated over N tiles)
#   g2   = ReLU(acc @ w2 + b2) @ (w1g * scale)  (finalize on last step)
# ---------------------------------------------------------------------------
def _global_feat_kernel(m_ref, x_ref, w2_ref, b2_ref, w1g_ref, g2_ref, acc_ref):
    @pl.when(pl.program_id(0) == 0)
    def _():
        acc_ref[...] = jnp.zeros_like(acc_ref)

    acc_ref[...] += jnp.dot(m_ref[...], x_ref[...],
                            preferred_element_type=jnp.float32)

    @pl.when(pl.program_id(0) == pl.num_programs(0) - 1)
    def _():
        g = jnp.maximum(
            jnp.dot(acc_ref[...], w2_ref[...],
                    preferred_element_type=jnp.float32) + b2_ref[...], 0.0)
        g2_ref[...] = jnp.dot(g, w1g_ref[...],
                              preferred_element_type=jnp.float32)


# ---------------------------------------------------------------------------
# Kernel B: per-point fused (BN-folded) Linear1 + per-batch global add + ReLU
#   out = ReLU(x @ w1x' + g2[batch_id] + bias')
# batch_id is derived in-kernel from the offsets in SMEM (scalar prefetch),
# so there is no dense select matrix and no extra HBM stream.
# ---------------------------------------------------------------------------
def _fuse_kernel(off_ref, x_ref, w1x_ref, g2_ref, bias_ref, o_ref):
    tile_n, c = o_ref.shape
    nb = off_ref.shape[0]

    row0 = pl.program_id(0) * tile_n
    rows = row0 + jax.lax.broadcasted_iota(jnp.int32, (tile_n, 1), 0)

    lin = jnp.dot(x_ref[...], w1x_ref[...],
                  preferred_element_type=jnp.float32) + bias_ref[...]

    g2 = g2_ref[...]                                   # (B, C) resident, f32
    gpp = jnp.zeros((tile_n, c), jnp.float32)
    start = 0
    for b in range(nb):                                # B is tiny -> unrolled VPU selects
        end = off_ref[b]
        mask = (rows >= start) & (rows < end)
        gpp = jnp.where(mask, g2[b][None, :], gpp)
        start = end

    o_ref[...] = jnp.maximum(lin + gpp, 0.0)


def transition_up(x, offsets, params, *, tile_n=512, matmul_dtype=jnp.float32):
    """TransitionUp forward (pxo2 is None branch).

    x: (N, C) float32; offsets: (B,) int32 cumulative batch end indices.
    matmul_dtype: dtype of the big matmul operands (x, w1x).  bfloat16 halves
    the dominant HBM streams; accumulation / epilogue stay float32.
    """
    N, C = x.shape
    B = offsets.shape[0]

    tile_n = max(128, (int(tile_n) // 128) * 128)      # lane-aligned row tile
    n_pad = -(-N // tile_n) * tile_n
    num_tiles = n_pad // tile_n

    offsets = offsets.astype(jnp.int32)

    # ---- glue (plain JAX): folded params + normalized membership matrix ----
    starts = jnp.concatenate([jnp.zeros((1,), jnp.int32), offsets[:-1]])
    counts = jnp.maximum((offsets - starts).astype(jnp.float32), 1.0)  # empty-batch guard
    row_ids = jnp.arange(n_pad, dtype=jnp.int32)
    batch_id = jnp.sum((row_ids[:, None] >= offsets[None, :]).astype(jnp.int32), axis=1)
    onehot = (batch_id[:, None] == jnp.arange(B, dtype=jnp.int32)[None, :]).astype(jnp.float32)
    mean_mat = onehot.T / counts[:, None]              # (B, n_pad); padded cols are 0

    w2, b2 = params["w2"], params["b2"]
    w1, b1 = params["w1"], params["b1"]
    scale, shift = params["bn_scale"], params["bn_shift"]
    w1x_f = w1[:C, :] * scale[None, :]                 # BN folded into Linear1
    w1g_f = w1[C:, :] * scale[None, :]
    bias_f = (b1 * scale + shift).reshape(1, C)

    x_pad = jnp.pad(x, ((0, n_pad - N), (0, 0)))
    x_mm = x_pad.astype(matmul_dtype)                  # dominant HBM stream
    w1x_mm = w1x_f.astype(matmul_dtype)

    reduce_params = pltpu.CompilerParams(
        dimension_semantics=("arbitrary",), vmem_limit_bytes=_VMEM_LIMIT)
    parallel_params = pltpu.CompilerParams(
        dimension_semantics=("parallel",), vmem_limit_bytes=_VMEM_LIMIT)

    # ---- Kernel A: (B, C) per-batch global features, tiled over N ----
    g2 = pl.pallas_call(
        _global_feat_kernel,
        out_shape=jax.ShapeDtypeStruct((B, C), jnp.float32),
        grid=(num_tiles,),
        in_specs=[
            pl.BlockSpec((B, tile_n), lambda i: (0, i)),   # mean-matrix tile
            pl.BlockSpec((tile_n, C), lambda i: (i, 0)),   # x tile
            pl.BlockSpec((C, C), lambda i: (0, 0)),        # w2
            pl.BlockSpec((1, C), lambda i: (0, 0)),        # b2
            pl.BlockSpec((C, C), lambda i: (0, 0)),        # w1g (BN folded)
        ],
        out_specs=pl.BlockSpec((B, C), lambda i: (0, 0)),
        scratch_shapes=[pltpu.VMEM((B, C), jnp.float32)],
        compiler_params=reduce_params,
    )(mean_mat, x_mm, w2, b2.reshape(1, C), w1g_f)

    # ---- Kernel B: tiled over points, offsets prefetched to SMEM ----
    out_pad = pl.pallas_call(
        _fuse_kernel,
        out_shape=jax.ShapeDtypeStruct((n_pad, C), jnp.float32),
        grid_spec=pltpu.PrefetchScalarGridSpec(
            num_scalar_prefetch=1,
            grid=(num_tiles,),
            in_specs=[
                pl.BlockSpec((tile_n, C), lambda i, off: (i, 0)),  # x tile
                pl.BlockSpec((C, C), lambda i, off: (0, 0)),       # w1x (BN folded)
                pl.BlockSpec((B, C), lambda i, off: (0, 0)),       # g2
                pl.BlockSpec((1, C), lambda i, off: (0, 0)),       # folded bias
            ],
            out_specs=pl.BlockSpec((tile_n, C), lambda i, off: (i, 0)),
        ),
        compiler_params=parallel_params,
    )(offsets, x_mm, w1x_mm, g2, bias_f)

    return out_pad[:N]


# ---------------------------------------------------------------------------
# Pure numpy reference mirroring the PyTorch loop (eval-mode BN folded)
# ---------------------------------------------------------------------------
def reference(x, offsets, params):
    x = np.asarray(x); o = np.asarray(offsets)
    w2, b2 = np.asarray(params["w2"]), np.asarray(params["b2"])
    w1, b1 = np.asarray(params["w1"]), np.asarray(params["b1"])
    scale, shift = np.asarray(params["bn_scale"]), np.asarray(params["bn_shift"])
    chunks = []
    for i in range(o.shape[0]):
        s_i = 0 if i == 0 else o[i - 1]
        e_i = o[i]
        cnt = e_i - s_i
        x_b = x[s_i:e_i, :]
        mean = x_b.sum(0, keepdims=True) / cnt
        g = np.maximum(mean @ w2 + b2, 0.0)                 # linear2 + ReLU
        z = np.concatenate([x_b, np.repeat(g, cnt, axis=0)], axis=1)
        chunks.append(z)
    z = np.concatenate(chunks, axis=0)
    lin = z @ w1 + b1                                       # linear1
    y = lin * scale + shift                                 # BN (eval, folded)
    return np.maximum(y, 0.0)                               # ReLU


if __name__ == "__main__":
    C = 16           # in_planes
    N = 1000         # total number of points (not a tile multiple on purpose)
    B = 4            # point clouds in the batch
    key = jax.random.PRNGKey(0)
    ks = jax.random.split(key, 8)

    # inputs: (p, x, o) -- p (coords) is unused in this branch
    p = jax.random.normal(ks[0], (N, 3), jnp.float32)
    x = jax.random.normal(ks[1], (N, C), jnp.float32)
    offsets = jnp.array([260, 512, 771, 1000], dtype=jnp.int32)   # cumulative ends

    # deterministic synthetic parameters (shapes from __init__, out_planes=None)
    w2 = jax.random.normal(ks[2], (C, C), jnp.float32) * 0.1
    b2 = jax.random.normal(ks[3], (C,), jnp.float32) * 0.1
    w1 = jax.random.normal(ks[4], (2 * C, C), jnp.float32) * 0.1
    b1 = jax.random.normal(ks[5], (C,), jnp.float32) * 0.1
    gamma = 1.0 + 0.1 * jax.random.normal(ks[6], (C,), jnp.float32)
    beta = 0.1 * jax.random.normal(ks[7], (C,), jnp.float32)
    running_mean = jnp.linspace(-0.2, 0.2, C, dtype=jnp.float32)
    running_var = jnp.linspace(0.5, 1.5, C, dtype=jnp.float32)
    eps = 1e-5
    bn_scale = gamma / jnp.sqrt(running_var + eps)
    bn_shift = beta - running_mean * bn_scale

    params = dict(w2=w2, b2=b2, w1=w1, b1=b1, bn_scale=bn_scale, bn_shift=bn_shift)

    ref = reference(x, offsets, params)

    # f32 matmul path: matches the PyTorch reference tightly.
    out = jax.block_until_ready(transition_up(x, offsets, params))
    np.testing.assert_allclose(np.asarray(out), ref, rtol=2e-4, atol=2e-4)

    # bf16 matmul-operand path (HBM-bandwidth optimization): deliberate
    # precision deviation from the f32 reference -> loose tolerance.
    out_bf16 = jax.block_until_ready(
        transition_up(x, offsets, params, matmul_dtype=jnp.bfloat16))
    np.testing.assert_allclose(np.asarray(out_bf16), ref, rtol=5e-2, atol=5e-2)

    print("KERNEL_OK")
</pallas_src>

<mosaic_0001>
module attributes {stable_mosaic.version = 11 : i64} {
  func.func @_global_feat_kernel(%arg0: i32, %arg1: memref<4x512xf32, #tpu.memory_space<vmem>>, %arg2: memref<512x16xf32, #tpu.memory_space<vmem>>, %arg3: memref<16x16xf32, #tpu.memory_space<vmem>>, %arg4: memref<1x16xf32, #tpu.memory_space<vmem>>, %arg5: memref<16x16xf32, #tpu.memory_space<vmem>>, %arg6: memref<4x16xf32, #tpu.memory_space<vmem>>, %arg7: memref<4x16xf32, #tpu.memory_space<vmem>>) attributes {dimension_semantics = [#tpu.dimension_semantics<arbitrary>], iteration_bounds = array<i64: 2>, scalar_prefetch = 0 : i64, scratch_operands = 1 : i64, tpu.core_type = #tpu.core_type<tc>, window_params = [{transform_indices = @transform_0, window_bounds = array<i64: 4, 512>}, {transform_indices = @transform_1, window_bounds = array<i64: 512, 16>}, {pipeline_mode = #tpu.pipeline_mode<synchronous>, transform_indices = @transform_2, window_bounds = array<i64: 16, 16>}, {pipeline_mode = #tpu.pipeline_mode<synchronous>, transform_indices = @transform_3, window_bounds = array<i64: 1, 16>}, {pipeline_mode = #tpu.pipeline_mode<synchronous>, transform_indices = @transform_4, window_bounds = array<i64: 16, 16>}, {pipeline_mode = #tpu.pipeline_mode<synchronous>, transform_indices = @transform_5, window_bounds = array<i64: 4, 16>}]} {
    %c0_i32 = arith.constant 0 : i32
    %0 = arith.cmpi eq, %arg0, %c0_i32 : i32
    %1 = arith.extui %0 : i1 to i32
    %c0_i32_0 = arith.constant 0 : i32
    %2 = arith.cmpi ne, %1, %c0_i32_0 : i32
    scf.if %2 {
      %cst_9 = arith.constant 0.000000e+00 : f32
      %12 = vector.broadcast %cst_9 : f32 to vector<4x16xf32>
      %c0_10 = arith.constant 0 : index
      %c0_11 = arith.constant 0 : index
      %13 = vector.load %arg7[%c0_10, %c0_11] : memref<4x16xf32, #tpu.memory_space<vmem>>, vector<4x16xf32>
      tpu.vector_store %arg7[%c0_10, %c0_11], %12 {strides = array<i32>} : memref<4x16xf32, #tpu.memory_space<vmem>>, vector<4x16xf32>,
    } else {
    }
    %c0 = arith.constant 0 : index
    %c0_1 = arith.constant 0 : index
    %3 = vector.load %arg7[%c0, %c0_1] : memref<4x16xf32, #tpu.memory_space<vmem>>, vector<4x16xf32>
    %c0_2 = arith.constant 0 : index
    %c0_3 = arith.constant 0 : index
    %4 = vector.load %arg1[%c0_2, %c0_3] : memref<4x512xf32, #tpu.memory_space<vmem>>, vector<4x512xf32>
    %c0_4 = arith.constant 0 : index
    %c0_5 = arith.constant 0 : index
    %5 = vector.load %arg2[%c0_4, %c0_5] : memref<512x16xf32, #tpu.memory_space<vmem>>, vector<512x16xf32>
    %cst = arith.constant dense<0.000000e+00> : vector<4x16xf32>
    %6 = tpu.matmul %4, %5, %cst {dimension_numbers = #tpu.dot_dimension_numbers<[1], [0], [0], [1], [0, 0, 1, 1], [], []>} : vector<4x512xf32>, vector<512x16xf32>, vector<4x16xf32> -> vector<4x16xf32>
    %7 = arith.addf %3, %6 : vector<4x16xf32>
    %c0_6 = arith.constant 0 : index
    %c0_7 = arith.constant 0 : index
    %8 = vector.load %arg7[%c0_6, %c0_7] : memref<4x16xf32, #tpu.memory_space<vmem>>, vector<4x16xf32>
    tpu.vector_store %arg7[%c0_6, %c0_7], %7 {strides = array<i32>} : memref<4x16xf32, #tpu.memory_space<vmem>>, vector<4x16xf32>,
    %c1_i32 = arith.constant 1 : i32
    %9 = arith.cmpi eq, %arg0, %c1_i32 : i32
    %10 = arith.extui %9 : i1 to i32
    %c0_i32_8 = arith.constant 0 : i32
    %11 = arith.cmpi ne, %10, %c0_i32_8 : i32
    scf.if %11 {
      %c0_9 = arith.constant 0 : index
      %c0_10 = arith.constant 0 : index
      %12 = vector.load %arg7[%c0_9, %c0_10] : memref<4x16xf32, #tpu.memory_space<vmem>>, vector<4x16xf32>
      %c0_11 = arith.constant 0 : index
      %c0_12 = arith.constant 0 : index
      %13 = vector.load %arg3[%c0_11, %c0_12] : memref<16x16xf32, #tpu.memory_space<vmem>>, vector<16x16xf32>
      %cst_13 = arith.constant dense<0.000000e+00> : vector<4x16xf32>
      %14 = tpu.matmul %12, %13, %cst_13 {dimension_numbers = #tpu.dot_dimension_numbers<[1], [0], [0], [1], [0, 0, 1, 1], [], []>} : vector<4x16xf32>, vector<16x16xf32>, vector<4x16xf32> -> vector<4x16xf32>
      %c0_14 = arith.constant 0 : index
      %c0_15 = arith.constant 0 : index
      %15 = vector.load %arg4[%c0_14, %c0_15] : memref<1x16xf32, #tpu.memory_space<vmem>>, vector<1x16xf32>
      %16 = vector.broadcast %15 : vector<1x16xf32> to vector<4x16xf32>
      %17 = arith.addf %14, %16 : vector<4x16xf32>
      %cst_16 = arith.constant 0.000000e+00 : f32
      %18 = vector.broadcast %cst_16 : f32 to vector<4x16xf32>
      %19 = arith.maximumf %17, %18 : vector<4x16xf32>
      %c0_17 = arith.constant 0 : index
      %c0_18 = arith.constant 0 : index
      %20 = vector.load %arg5[%c0_17, %c0_18] : memref<16x16xf32, #tpu.memory_space<vmem>>, vector<16x16xf32>
      %cst_19 = arith.constant dense<0.000000e+00> : vector<4x16xf32>
      %21 = tpu.matmul %19, %20, %cst_19 {dimension_numbers = #tpu.dot_dimension_numbers<[1], [0], [0], [1], [0, 0, 1, 1], [], []>} : vector<4x16xf32>, vector<16x16xf32>, vector<4x16xf32> -> vector<4x16xf32>
      %c0_20 = arith.constant 0 : index
      %c0_21 = arith.constant 0 : index
      %22 = vector.load %arg6[%c0_20, %c0_21] : memref<4x16xf32, #tpu.memory_space<vmem>>, vector<4x16xf32>
      tpu.vector_store %arg6[%c0_20, %c0_21], %21 {strides = array<i32>} : memref<4x16xf32, #tpu.memory_space<vmem>>, vector<4x16xf32>,
    } else {
    }
    return
  }
  func.func @transform_0(%arg0: i32) -> (i32, i32) {
    %c0_i32 = arith.constant 0 : i32
    %c0_i32_0 = arith.constant 0 : i32
    return %c0_i32, %arg0 : i32, i32
  }
  func.func @transform_1(%arg0: i32) -> (i32, i32) {
    %c0_i32 = arith.constant 0 : i32
    %c0_i32_0 = arith.constant 0 : i32
    return %arg0, %c0_i32 : i32, i32
  }
  func.func @transform_2(%arg0: i32) -> (i32, i32) {
    %c0_i32 = arith.constant 0 : i32
    %c0_i32_0 = arith.constant 0 : i32
    %c0_i32_1 = arith.constant 0 : i32
    return %c0_i32, %c0_i32_0 : i32, i32
  }
  func.func @transform_3(%arg0: i32) -> (i32, i32) {
    %c0_i32 = arith.constant 0 : i32
    %c0_i32_0 = arith.constant 0 : i32
    %c0_i32_1 = arith.constant 0 : i32
    return %c0_i32, %c0_i32_0 : i32, i32
  }
  func.func @transform_4(%arg0: i32) -> (i32, i32) {
    %c0_i32 = arith.constant 0 : i32
    %c0_i32_0 = arith.constant 0 : i32
    %c0_i32_1 = arith.constant 0 : i32
    return %c0_i32, %c0_i32_0 : i32, i32
  }
  func.func @transform_5(%arg0: i32) -> (i32, i32) {
    %c0_i32 = arith.constant 0 : i32
    %c0_i32_0 = arith.constant 0 : i32
    %c0_i32_1 = arith.constant 0 : i32
    return %c0_i32, %c0_i32_0 : i32, i32
  }
}

</mosaic_0001>

<llo_original>
// kernel: tpu_custom_call.1
$region0: #{tpu_custom_call.1}
  #allocation0 [shape = 'u32[]', space=smem, size = 0x4, offset = 0x4, fixed_abs, tag = 'smem constant byte address 0x4 - core index']
  #allocation1 [shape = 'u32[72,128]{1,0:T(1,128)}', space=vmem, size = 0x9000, scoped, tag = 'internal scratch']
  #allocation2 [shape = 'f32[4,16]{1,0:T(4,128)}', space=vmem, size = 0x800, scoped, tag = 'scratch operand']
  %s0 = inlined_call_operand.vmem [shape: f32[4,1024], index: 0, kind: input, shape index: {}]
  %s1 = inlined_call_operand.vmem [shape: f32[1024,16], index: 1, kind: input, shape index: {}]
  %s2 = inlined_call_operand.vmem [shape: f32[16,16], index: 2, kind: input, shape index: {}]
  %s3 = inlined_call_operand.vmem [shape: f32[1,16], index: 3, kind: input, shape index: {}]
  %s4 = inlined_call_operand.vmem [shape: f32[16,16], index: 4, kind: input, shape index: {}]
  %s5 = inlined_call_operand.hbm [shape: f32[4,16], index: 5, kind: output, shape index: {}]
  %s6 = sld [smem:[#allocation0]]
  $region61: #{tpu_custom_call.1} parent=0
    _
  %s8 = ssub.s32 1, %s6
  %s9 = scalar_select 0, %s8, %s6
  $region1: #{tpu_custom_call.1} parent=0
    #allocation3 [shape = 'u8[2048]{0}', space=vmem, size = 0x800, scoped, tag = 'output window, operand 0, single buffered']
    #allocation4 [shape = 's32[2]{0}', space=sflag, size = 0x8, scoped, tag = 'scoped memory for tpu_custom_call.1']
    %10 = vsyncpa [#allocation4], 0
    loop: start=0, step=1, limit=4
    $region2: #{tpu_custom_call.1} parent=1 // loop_pre_header
      _
    $region3: #{tpu_custom_call.1} parent=1 // loop_header
      %s12 = sphi 0, %s16
      %p13 = scmp.ge.s32.totalorder %s12, 4
      %s22 = sphi 0, %s24
      %s25 = sphi 0, %s22
      %s26 = sphi 0, %s25
      %s42 = sphi 0, %s26
      %s48 = sphi 0, %s50
      %s51 = sphi 0, %s48
      %s52 = sphi 0, %s51
      %s68 = sphi 0, %s52
      %s72 = sphi 0, %s72
      %s74 = sphi 0, %s72
      %s75 = sphi 0, %s74
      %s89 = sphi 0, %s75
      %s93 = sphi 0, %s93
      %s95 = sphi 0, %s93
      %s96 = sphi 0, %s95
      %s110 = sphi 0, %s96
      %s114 = sphi 0, %s114
      %s116 = sphi 0, %s114
      %s117 = sphi 0, %s116
      %s131 = sphi 0, %s117
      %s135 = sphi 0, %s135
      %s137 = sphi 0, %s135
      %s138 = sphi 0, %s137
      %s152 = sphi 0, %s138
    $region4: #{tpu_custom_call.1} parent=1 // loop_header_branch
      %15 = sbr.rel (%p13) target = $region8
    $region5: #{tpu_custom_call.1} parent=1 // loop_body
      %s17 = ssub.s32 %s12, 1
      %s18 = ssub.s32 %s12, 2
      %s19 = sadd.s32 %s12, 1
      %s20 = ssub.s32 %s12, %s19
      %p21 = scmp.eq.s32.totalorder %s20, 0
      %s23 = sadd.s32 %s22, 1
      %s24 = scalar_select %p21, %s22, %s23
      %p27 = pneg %p21
      %p28 = scmp.eq.s32.totalorder %s12, 1
      %p29 = por %p27, %p28
      %p30 = scmp.ne.s32.totalorder %s22, %s25
      %p31 = scmp.eq.s32.totalorder %s12, 0
      %p32 = por %p30, %p31
      %p33 = scmp.ne.s32.totalorder %s22, %s25
      %p34 = scmp.eq.s32.totalorder %s17, 1
      %p35 = por %p33, %p34
      %p36 = scmp.ne.s32.totalorder %s25, %s26
      %p37 = scmp.eq.s32.totalorder %s17, 0
      %p38 = por %p36, %p37
      %p39 = scmp.ne.s32.totalorder %s25, %s26
      %p40 = scmp.eq.s32.totalorder %s18, 1
      %p41 = por %p39, %p40
      %p43 = scmp.ne.s32.totalorder %s26, %s42
      %p44 = scmp.eq.s32.totalorder %s18, 0
      %p45 = por %p43, %p44
      %s46 = ssub.s32 %s12, %s19
      %p47 = scmp.eq.s32.totalorder %s46, 0
      %s49 = sadd.s32 %s48, 1
      %s50 = scalar_select %p47, %s48, %s49
      %p53 = pneg %p47
      %p54 = scmp.eq.s32.totalorder %s12, 1
      %p55 = por %p53, %p54
      %p56 = scmp.ne.s32.totalorder %s48, %s51
      %p57 = scmp.eq.s32.totalorder %s12, 0
      %p58 = por %p56, %p57
      %p59 = scmp.ne.s32.totalorder %s48, %s51
      %p60 = scmp.eq.s32.totalorder %s17, 1
      %p61 = por %p59, %p60
      %p62 = scmp.ne.s32.totalorder %s51, %s52
      %p63 = scmp.eq.s32.totalorder %s17, 0
      %p64 = por %p62, %p63
      %p65 = scmp.ne.s32.totalorder %s51, %s52
      %p66 = scmp.eq.s32.totalorder %s18, 1
      %p67 = por %p65, %p66
      %p69 = scmp.ne.s32.totalorder %s52, %s68
      %p70 = scmp.eq.s32.totalorder %s18, 0
      %p71 = por %p69, %p70
      %s73 = sadd.s32 %s72, 1
      %p76 = scmp.eq.s32.totalorder %s12, 1
      %p77 = scmp.ne.s32.totalorder %s72, %s74
      %p78 = scmp.eq.s32.totalorder %s12, 0
      %p79 = por %p77, %p78
      %p80 = scmp.ne.s32.totalorder %s72, %s74
      %p81 = scmp.eq.s32.totalorder %s17, 1
      %p82 = por %p80, %p81
      %p83 = scmp.ne.s32.totalorder %s74, %s75
      %p84 = scmp.eq.s32.totalorder %s17, 0
      %p85 = por %p83, %p84
      %p86 = scmp.ne.s32.totalorder %s74, %s75
      %p87 = scmp.eq.s32.totalorder %s18, 1
      %p88 = por %p86, %p87
      %p90 = scmp.ne.s32.totalorder %s75, %s89
      %p91 = scmp.eq.s32.totalorder %s18, 0
      %p92 = por %p90, %p91
      %s94 = sadd.s32 %s93, 1
      %p97 = scmp.eq.s32.totalorder %s12, 1
      %p98 = scmp.ne.s32.totalorder %s93, %s95
      %p99 = scmp.eq.s32.totalorder %s12, 0
      %p100 = por %p98, %p99
      %p101 = scmp.ne.s32.totalorder %s93, %s95
      %p102 = scmp.eq.s32.totalorder %s17, 1
      %p103 = por %p101, %p102
      %p104 = scmp.ne.s32.totalorder %s95, %s96
      %p105 = scmp.eq.s32.totalorder %s17, 0
      %p106 = por %p104, %p105
      %p107 = scmp.ne.s32.totalorder %s95, %s96
      %p108 = scmp.eq.s32.totalorder %s18, 1
      %p109 = por %p107, %p108
      %p111 = scmp.ne.s32.totalorder %s96, %s110
      %p112 = scmp.eq.s32.totalorder %s18, 0
      %p113 = por %p111, %p112
      %s115 = sadd.s32 %s114, 1
      %p118 = scmp.eq.s32.totalorder %s12, 1
      %p119 = scmp.ne.s32.totalorder %s114, %s116
      %p120 = scmp.eq.s32.totalorder %s12, 0
      %p121 = por %p119, %p120
      %p122 = scmp.ne.s32.totalorder %s114, %s116
      %p123 = scmp.eq.s32.totalorder %s17, 1
      %p124 = por %p122, %p123
      %p125 = scmp.ne.s32.totalorder %s116, %s117
      %p126 = scmp.eq.s32.totalorder %s17, 0
      %p127 = por %p125, %p126
      %p128 = scmp.ne.s32.totalorder %s116, %s117
      %p129 = scmp.eq.s32.totalorder %s18, 1
      %p130 = por %p128, %p129
      %p132 = scmp.ne.s32.totalorder %s117, %s131
      %p133 = scmp.eq.s32.totalorder %s18, 0
      %p134 = por %p132, %p133
      %s136 = sadd.s32 %s135, 1
      %p139 = scmp.eq.s32.totalorder %s12, 1
      %p140 = scmp.ne.s32.totalorder %s135, %s137
      %p141 = scmp.eq.s32.totalorder %s12, 0
      %p142 = por %p140, %p141
      %p143 = scmp.ne.s32.totalorder %s135, %s137
      %p144 = scmp.eq.s32.totalorder %s17, 1
      %p145 = por %p143, %p144
      %p146 = scmp.ne.s32.totalorder %s137, %s138
      %p147 = scmp.eq.s32.totalorder %s17, 0
      %p148 = por %p146, %p147
      %p149 = scmp.ne.s32.totalorder %s137, %s138
      %p150 = scmp.eq.s32.totalorder %s18, 1
      %p151 = por %p149, %p150
      %p153 = scmp.ne.s32.totalorder %s138, %s152
      %p154 = scmp.eq.s32.totalorder %s18, 0
      %p155 = por %p153, %p154
      %p156 = scmp.le.s32.totalorder 1, %s12
      %p157 = scmp.lt.s32.totalorder %s12, 3
      %p158 = pnand %p156, %p157
      %p159 = pneg %p158
      // Predicated region
      $region9: #{tpu_custom_call.1} parent=5 // pred_check
        _
      $region10: #{tpu_custom_call.1} parent=5 // pred_check_branch
        %161 = sbr.rel (%p158) target = $region12
      $region11: #{tpu_custom_call.1} parent=5 // pred_region
        %s162 = ssub.s32 %s12, 1
        // Predicated region
        $region13: #{tpu_custom_call.1} parent=11 // pred_check
          %p163 = pneg %p85
        $region14: #{tpu_custom_call.1} parent=11 // pred_check_branch
          %165 = sbr.rel (%p163) target = $region16
        $region15: #{tpu_custom_call.1} parent=11 // pred_region
          _
        $region16: #{tpu_custom_call.1} parent=11 // pred_fallthru
          _
        // Predicated region
        $region17: #{tpu_custom_call.1} parent=11 // pred_check
          %p166 = pneg %p106
        $region18: #{tpu_custom_call.1} parent=11 // pred_check_branch
          %168 = sbr.rel (%p166) target = $region20
        $region19: #{tpu_custom_call.1} parent=11 // pred_region
          _
        $region20: #{tpu_custom_call.1} parent=11 // pred_fallthru
          _
        // Predicated region
        $region21: #{tpu_custom_call.1} parent=11 // pred_check
          %p169 = pneg %p127
        $region22: #{tpu_custom_call.1} parent=11 // pred_check_branch
          %171 = sbr.rel (%p169) target = $region24
        $region23: #{tpu_custom_call.1} parent=11 // pred_region
          _
        $region24: #{tpu_custom_call.1} parent=11 // pred_fallthru
          _
      $region12: #{tpu_custom_call.1} parent=5 // pred_fallthru
        _
      %p172 = scmp.lt.s32.totalorder %s12, 2
      // Predicated region
      $region25: #{tpu_custom_call.1} parent=5 // pred_check
        %p173 = pneg %p172
      $region26: #{tpu_custom_call.1} parent=5 // pred_check_branch
        %175 = sbr.rel (%p173) target = $region28
      $region27: #{tpu_custom_call.1} parent=5 // pred_region
        // Predicated region
        $region29: #{tpu_custom_call.1} parent=27 // pred_check
          %p176 = pneg %p32
        $region30: #{tpu_custom_call.1} parent=27 // pred_check_branch
          %178 = sbr.rel (%p176) target = $region32
        $region31: #{tpu_custom_call.1} parent=27 // pred_region
          %s179 = smul.u32 4, %s12
          %p180 = scmp.lt.s32.totalorder %s179, 7
          %s181 = scalar_select %p180, %s179, 7
          %s182 = smul.addr %s181, 4
          %s183 = scalar_lea.vmem %s0, %s182
          %s184 = smul.u32 4, %s12
        $region32: #{tpu_custom_call.1} parent=27 // pred_fallthru
          _
        // Predicated region
        $region33: #{tpu_custom_call.1} parent=27 // pred_check
          %p185 = pneg %p58
        $region34: #{tpu_custom_call.1} parent=27 // pred_check_branch
          %187 = sbr.rel (%p185) target = $region36
        $region35: #{tpu_custom_call.1} parent=27 // pred_region
          %s188 = smul.u32 64, %s12
          %p189 = scmp.lt.s32.totalorder %s188, 127
          %s190 = scalar_select %p189, %s188, 127
          %s191 = smul.addr %s190, 8
          %s192 = scalar_lea.vmem %s1, %s191
          %s193 = smul.u32 64, %s12
        $region36: #{tpu_custom_call.1} parent=27 // pred_fallthru
          _
      $region28: #{tpu_custom_call.1} parent=5 // pred_fallthru
        _
      %p194 = scmp.le.s32.totalorder 1, %s12
      %p195 = scmp.lt.s32.totalorder %s12, 3
      %p196 = pnand %p194, %p195
      %p197 = pneg %p196
      // Predicated region
      $region37: #{tpu_custom_call.1} parent=5 // pred_check
        _
      $region38: #{tpu_custom_call.1} parent=5 // pred_check_branch
        %199 = sbr.rel (%p196) target = $region40
      $region39: #{tpu_custom_call.1} parent=5 // pred_region
        %s200 = ssub.s32 %s12, 1
        %s201 = smul.u32 4, %s17
        %p202 = scmp.lt.s32.totalorder %s201, 7
        %s203 = scalar_select %p202, %s201, 7
        %s204 = smul.addr %s203, 4
        %s205 = scalar_lea.vmem %s0, %s204
        %p206 = pneg %p38
        %p207 = pneg %p35
        %s208 = smul.u32 64, %s17
        %p209 = scmp.lt.s32.totalorder %s208, 127
        %s210 = scalar_select %p209, %s208, 127
        %s211 = smul.addr %s210, 8
        %s212 = scalar_lea.vmem %s1, %s211
        %p213 = pneg %p64
        %p214 = pneg %p61
        %p215 = pneg %p85
        %p216 = pneg %p82
        %p217 = pneg %p106
        %p218 = pneg %p103
        %p219 = pneg %p127
        %p220 = pneg %p124
        %p221 = pneg %p148
        %p222 = pneg %p145
        %s223 = smul.u32 4, %s17
        %p224 = scmp.lt.s32.totalorder %s223, 7
        %s225 = scalar_select %p224, %s223, 7
        %s226 = smul.addr %s225, 4
        %s227 = scalar_lea.vmem %s0, %s226
        %s228 = smul.u32 4, %s17
        %s229 = smul.u32 64, %s17
        %p230 = scmp.lt.s32.totalorder %s229, 127
        %s231 = scalar_select %p230, %s229, 127
        %s232 = smul.addr %s231, 8
        %s233 = scalar_lea.vmem %s1, %s232
        %s234 = smul.u32 64, %s17
        %p235 = scmp.eq.s32.totalorder %s17, 0
        // Predicated region
        $region41: #{tpu_custom_call.1} parent=39 // pred_check
          %p236 = pneg %p235
        $region42: #{tpu_custom_call.1} parent=39 // pred_check_branch
          %238 = sbr.rel (%p236) target = $region44
        $region43: #{tpu_custom_call.1} parent=39 // pred_region
          %vm239 = vcmask 125952
          %240 = vst.msk [vmem:[#allocation2] sm:$0xf] %vm239, 0.0
        $region44: #{tpu_custom_call.1} parent=39 // pred_fallthru
          _
        %v241 = vld [vmem:[#allocation2] sm:$0xf]
        %v242 = vld [vmem:[%s227] sm:$0xff]
        %v243 = vld [vmem:[%s227 + $0x8] sm:$0xff]
        %v244 = vld [vmem:[%s233] sm:$0xff]
        %v245 = vld [vmem:[%s233 + $0x8] sm:$0xff]
        %v246 = vld [vmem:[%s233 + $0x10] sm:$0xff]
        %v247 = vld [vmem:[%s233 + $0x18] sm:$0xff]
        %v248 = vld [vmem:[%s233 + $0x20] sm:$0xff]
        %v249 = vld [vmem:[%s233 + $0x28] sm:$0xff]
        %v250 = vld [vmem:[%s233 + $0x30] sm:$0xff]
        %v251 = vld [vmem:[%s233 + $0x38] sm:$0xff]
        %v252 = vld [vmem:[%s233 + $0x40] sm:$0xff]
        %v253 = vld [vmem:[%s233 + $0x48] sm:$0xff]
        %v254 = vld [vmem:[%s233 + $0x50] sm:$0xff]
        %v255 = vld [vmem:[%s233 + $0x58] sm:$0xff]
        %v256 = vld [vmem:[%s233 + $0x60] sm:$0xff]
        %v257 = vld [vmem:[%s233 + $0x68] sm:$0xff]
        %v258 = vld [vmem:[%s233 + $0x70] sm:$0xff]
        %v259 = vld [vmem:[%s233 + $0x78] sm:$0xff]
        %v260 = vld [vmem:[%s233 + $0x80] sm:$0xff]
        %v261 = vld [vmem:[%s233 + $0x88] sm:$0xff]
        %v262 = vld [vmem:[%s233 + $0x90] sm:$0xff]
        %v263 = vld [vmem:[%s233 + $0x98] sm:$0xff]
        %v264 = vld [vmem:[%s233 + $0xa0] sm:$0xff]
        %v265 = vld [vmem:[%s233 + $0xa8] sm:$0xff]
        %v266 = vld [vmem:[%s233 + $0xb0] sm:$0xff]
        %v267 = vld [vmem:[%s233 + $0xb8] sm:$0xff]
        %v268 = vld [vmem:[%s233 + $0xc0] sm:$0xff]
        %v269 = vld [vmem:[%s233 + $0xc8] sm:$0xff]
        %v270 = vld [vmem:[%s233 + $0xd0] sm:$0xff]
        %v271 = vld [vmem:[%s233 + $0xd8] sm:$0xff]
        %v272 = vld [vmem:[%s233 + $0xe0] sm:$0xff]
        %v273 = vld [vmem:[%s233 + $0xe8] sm:$0xff]
        %v274 = vld [vmem:[%s233 + $0xf0] sm:$0xff]
        %v275 = vld [vmem:[%s233 + $0xf8] sm:$0xff]
        %v276 = vld [vmem:[%s233 + $0x100] sm:$0xff]
        %v277 = vld [vmem:[%s233 + $0x108] sm:$0xff]
        %v278 = vld [vmem:[%s233 + $0x110] sm:$0xff]
        %v279 = vld [vmem:[%s233 + $0x118] sm:$0xff]
        %v280 = vld [vmem:[%s233 + $0x120] sm:$0xff]
        %v281 = vld [vmem:[%s233 + $0x128] sm:$0xff]
        %v282 = vld [vmem:[%s233 + $0x130] sm:$0xff]
        %v283 = vld [vmem:[%s233 + $0x138] sm:$0xff]
        %v284 = vld [vmem:[%s233 + $0x140] sm:$0xff]
        %v285 = vld [vmem:[%s233 + $0x148] sm:$0xff]
        %v286 = vld [vmem:[%s233 + $0x150] sm:$0xff]
        %v287 = vld [vmem:[%s233 + $0x158] sm:$0xff]
        %v288 = vld [vmem:[%s233 + $0x160] sm:$0xff]
        %v289 = vld [vmem:[%s233 + $0x168] sm:$0xff]
        %v290 = vld [vmem:[%s233 + $0x170] sm:$0xff]
        %v291 = vld [vmem:[%s233 + $0x178] sm:$0xff]
        %v292 = vld [vmem:[%s233 + $0x180] sm:$0xff]
        %v293 = vld [vmem:[%s233 + $0x188] sm:$0xff]
        %v294 = vld [vmem:[%s233 + $0x190] sm:$0xff]
        %v295 = vld [vmem:[%s233 + $0x198] sm:$0xff]
        %v296 = vld [vmem:[%s233 + $0x1a0] sm:$0xff]
        %v297 = vld [vmem:[%s233 + $0x1a8] sm:$0xff]
        %v298 = vld [vmem:[%s233 + $0x1b0] sm:$0xff]
        %v299 = vld [vmem:[%s233 + $0x1b8] sm:$0xff]
        %v300 = vld [vmem:[%s233 + $0x1c0] sm:$0xff]
        %v301 = vld [vmem:[%s233 + $0x1c8] sm:$0xff]
        %v302 = vld [vmem:[%s233 + $0x1d0] sm:$0xff]
        %v303 = vld [vmem:[%s233 + $0x1d8] sm:$0xff]
        %v304 = vld [vmem:[%s233 + $0x1e0] sm:$0xff]
        %v305 = vld [vmem:[%s233 + $0x1e8] sm:$0xff]
        %v306 = vld [vmem:[%s233 + $0x1f0] sm:$0xff]
        %v307 = vld [vmem:[%s233 + $0x1f8] sm:$0xff]
        %310 = vst [vmem:[#allocation1] ss:$2 sm:$0xff] %v242
        %s311 = scalar_lea.vmem [#allocation1], 16
        %312 = vst [vmem:[%s311] ss:$2 sm:$0xff] %v243
        %v313 = vld.sshfl [vmem:[#allocation1] sm:$0xff pattern:$0x75316420]
        %v314 = vld.sshfl [vmem:[#allocation1 + $0x8] sm:$0xff pattern:$0x75316420]
        %v315 = vld.sshfl [vmem:[#allocation1 + $0x10] sm:$0xff pattern:$0x75316420]
        %v316 = vld.sshfl [vmem:[#allocation1 + $0x18] sm:$0xff pattern:$0x75316420]
        %321 = vmatpush.msra.mxu0 %v259
        %322 = vmatpush.msra.mxu0 %v258
        %323 = vmatpush.msra.mxu0 %v257
        %324 = vmatpush.msra.mxu0 %v256
        %325 = vmatpush.msra.mxu0 %v255
        %326 = vmatpush.msra.mxu0 %v254
        %327 = vmatpush.msra.mxu0 %v253
        %328 = vmatpush.msra.mxu0 %v252
        %329 = vmatpush.msra.mxu0 %v251
        %330 = vmatpush.msra.mxu0 %v250
        %331 = vmatpush.msra.mxu0 %v249
        %332 = vmatpush.msra.mxu0 %v248
        %333 = vmatpush.msra.mxu0 %v247
        %334 = vmatpush.msra.mxu0 %v246
        %335 = vmatpush.msra.mxu0 %v245
        %336 = vmatpush.msra.mxu0 %v244
        %337 = vmatmul.f32.gmra.mxu0 %v313
        %v338 = vpop.f32.mrf.mxu0
        %v339 = vadd.f32 0.0, %v338
        %340 = vdwg.mxu0
        %341 = vmatpush.msra.mxu0 %v275
        %342 = vmatpush.msra.mxu0 %v274
        %343 = vmatpush.msra.mxu0 %v273
        %344 = vmatpush.msra.mxu0 %v272
        %345 = vmatpush.msra.mxu0 %v271
        %346 = vmatpush.msra.mxu0 %v270
        %347 = vmatpush.msra.mxu0 %v269
        %348 = vmatpush.msra.mxu0 %v268
        %349 = vmatpush.msra.mxu0 %v267
        %350 = vmatpush.msra.mxu0 %v266
        %351 = vmatpush.msra.mxu0 %v265
        %352 = vmatpush.msra.mxu0 %v264
        %353 = vmatpush.msra.mxu0 %v263
        %354 = vmatpush.msra.mxu0 %v262
        %355 = vmatpush.msra.mxu0 %v261
        %356 = vmatpush.msra.mxu0 %v260
        %357 = vmatmul.f32.gmra.mxu0 %v314
        %v358 = vpop.f32.mrf.mxu0
        %v359 = vadd.f32 %v339, %v358
        %360 = vdwg.mxu0
        %361 = vmatpush.msra.mxu0 %v291
        %362 = vmatpush.msra.mxu0 %v290
        %363 = vmatpush.msra.mxu0 %v289
        %364 = vmatpush.msra.mxu0 %v288
        %365 = vmatpush.msra.mxu0 %v287
        %366 = vmatpush.msra.mxu0 %v286
        %367 = vmatpush.msra.mxu0 %v285
        %368 = vmatpush.msra.mxu0 %v284
        %369 = vmatpush.msra.mxu0 %v283
        %370 = vmatpush.msra.mxu0 %v282
        %371 = vmatpush.msra.mxu0 %v281
        %372 = vmatpush.msra.mxu0 %v280
        %373 = vmatpush.msra.mxu0 %v279
        %374 = vmatpush.msra.mxu0 %v278
        %375 = vmatpush.msra.mxu0 %v277
        %376 = vmatpush.msra.mxu0 %v276
        %377 = vmatmul.f32.gmra.mxu0 %v315
        %v378 = vpop.f32.mrf.mxu0
        %v379 = vadd.f32 %v359, %v378
        %380 = vdwg.mxu0
        %381 = vmatpush.msra.mxu0 %v307
        %382 = vmatpush.msra.mxu0 %v306
        %383 = vmatpush.msra.mxu0 %v305
        %384 = vmatpush.msra.mxu0 %v304
        %385 = vmatpush.msra.mxu0 %v303
        %386 = vmatpush.msra.mxu0 %v302
        %387 = vmatpush.msra.mxu0 %v301
        %388 = vmatpush.msra.mxu0 %v300
        %389 = vmatpush.msra.mxu0 %v299
        %390 = vmatpush.msra.mxu0 %v298
        %391 = vmatpush.msra.mxu0 %v297
        %392 = vmatpush.msra.mxu0 %v296
        %393 = vmatpush.msra.mxu0 %v295
        %394 = vmatpush.msra.mxu0 %v294
        %395 = vmatpush.msra.mxu0 %v293
        %396 = vmatpush.msra.mxu0 %v292
        %397 = vmatmul.f32.gmra.mxu0 %v316
        %v398 = vpop.f32.mrf.mxu0
        %v399 = vadd.f32 %v379, %v398
        %400 = vdwg.mxu0
        %v401 = vadd.f32 %v241, %v399
        %vm402 = vcmask 125952
        %403 = vst.msk [vmem:[#allocation2] sm:$0xf] %vm402, %v401
        %p404 = scmp.eq.s32.totalorder %s17, 1
        // Predicated region
        $region45: #{tpu_custom_call.1} parent=39 // pred_check
          %p405 = pneg %p404
        $region46: #{tpu_custom_call.1} parent=39 // pred_check_branch
          %407 = sbr.rel (%p405) target = $region48
        $region47: #{tpu_custom_call.1} parent=39 // pred_region
          %v408 = vld [vmem:[#allocation2] sm:$0xf]
          %v409 = vld [vmem:[%s2] sm:$0xff]
          %v410 = vld [vmem:[%s2 + $0x8] sm:$0xff]
          %v411 = vld [vmem:[%s3] sm:$0x1]
          %v413 = vperm.slane %v411, 0
          %vm415 = vcmask 130048
          %v417 = vsel %vm415, %v408, 0
          %419 = vmatpush.msra.mxu0 0.0
          %420 = vmatpush.msra.mxu0 0.0
          %421 = vmatpush.msra.mxu0 0.0
          %422 = vmatpush.msra.mxu0 0.0
          %423 = vmatpush.msra.mxu0 0.0
          %424 = vmatpush.msra.mxu0 0.0
          %425 = vmatpush.msra.mxu0 0.0
          %426 = vmatpush.msra.mxu0 0.0
          %427 = vmatpush.msra.mxu0 0.0
          %428 = vmatpush.msra.mxu0 0.0
          %429 = vmatpush.msra.mxu0 0.0
          %430 = vmatpush.msra.mxu0 0.0
          %431 = vmatpush.msra.mxu0 0.0
          %432 = vmatpush.msra.mxu0 0.0
          %433 = vmatpush.msra.mxu0 %v410
          %434 = vmatpush.msra.mxu0 %v409
          %435 = vmatmul.f32.gmra.mxu0 %v417
          %v436 = vpop.f32.mrf.mxu0
          %v437 = vadd.f32 %v413, %v436
          %438 = vdwg.mxu0
          %v439 = vmax.f32 %v437, 0.0
          %v440 = vld [vmem:[%s4] sm:$0xff]
          %v441 = vld [vmem:[%s4 + $0x8] sm:$0xff]
          %v443 = vsel %vm415, %v439, 0
          %445 = vmatpush.msra.mxu0 0.0
          %446 = vmatpush.msra.mxu0 0.0
          %447 = vmatpush.msra.mxu0 0.0
          %448 = vmatpush.msra.mxu0 0.0
          %449 = vmatpush.msra.mxu0 0.0
          %450 = vmatpush.msra.mxu0 0.0
          %451 = vmatpush.msra.mxu0 0.0
          %452 = vmatpush.msra.mxu0 0.0
          %453 = vmatpush.msra.mxu0 0.0
          %454 = vmatpush.msra.mxu0 0.0
          %455 = vmatpush.msra.mxu0 0.0
          %456 = vmatpush.msra.mxu0 0.0
          %457 = vmatpush.msra.mxu0 0.0
          %458 = vmatpush.msra.mxu0 0.0
          %459 = vmatpush.msra.mxu0 %v441
          %460 = vmatpush.msra.mxu0 %v440
          %461 = vmatmul.f32.gmra.mxu0 %v443
          %v462 = vpop.f32.mrf.mxu0
          %v463 = vadd.f32 0.0, %v462
          %464 = vdwg.mxu0
          %465 = vst.msk [vmem:[#allocation3] sm:$0xf] %vm402, %v463
        $region48: #{tpu_custom_call.1} parent=39 // pred_fallthru
          _
        // Predicated region
        $region49: #{tpu_custom_call.1} parent=39 // pred_check
          %p466 = pneg %p145
        $region50: #{tpu_custom_call.1} parent=39 // pred_check_branch
          %468 = sbr.rel (%p466) target = $region52
        $region51: #{tpu_custom_call.1} parent=39 // pred_region
          %470 = vsyncadd [#allocation4], 0
          %s472 = sshll.u32 [#allocation3], 4
          %s473 = int_to_ptr.vmem [resolvable:$true] %s472
          %s474 = sshll.u32 %s5, 4
          %s475 = int_to_ptr.hbm [resolvable:$true] %s474
          %477 = dma.vmem_to_hbm [thread:$0]  %s473, 64, %s475, [#allocation4]
        $region52: #{tpu_custom_call.1} parent=39 // pred_fallthru
          _
        // Predicated region
        $region53: #{tpu_custom_call.1} parent=39 // pred_check
          %p478 = pneg %p145
        $region54: #{tpu_custom_call.1} parent=39 // pred_check_branch
          %480 = sbr.rel (%p478) target = $region56
        $region55: #{tpu_custom_call.1} parent=39 // pred_region
          %482 = dma.done [#allocation4], 64
        $region56: #{tpu_custom_call.1} parent=39 // pred_fallthru
          _
      $region40: #{tpu_custom_call.1} parent=5 // pred_fallthru
        _
      %p483 = scmp.le.s32.totalorder 2, %s12
      // Predicated region
      $region57: #{tpu_custom_call.1} parent=5 // pred_check
        %p484 = pneg %p483
      $region58: #{tpu_custom_call.1} parent=5 // pred_check_branch
        %486 = sbr.rel (%p484) target = $region60
      $region59: #{tpu_custom_call.1} parent=5 // pred_region
        %s487 = ssub.s32 %s12, 2
      $region60: #{tpu_custom_call.1} parent=5 // pred_fallthru
        _
    $region6: #{tpu_custom_call.1} parent=1 // loop_footer
      %s16 = sadd.s32 1, %s12
    $region7: #{tpu_custom_call.1} parent=1 // loop_footer_branch
      %11 = sbr.rel target = $region3
    $region8: #{tpu_custom_call.1} parent=1 // loop_exit
      _
    %488 = vsyncpa [#allocation4], 1
    %s489 = scalar_lea.sflag [#allocation4], 1
    %490 = vsyncpa %s489, 1

</llo_original>
